<compile_context>
chip_gen: v6e
topology: v6e:2x2x1
jax: 0.10.0
libtpu: 0.0.40
codegen_flags: <defaults>
</compile_context>

<pallas_src>
import functools

import jax
import jax.numpy as jnp
from jax.experimental import pallas as pl
from jax.experimental.pallas import tpu as pltpu

_LANES = 128
_SUBLANES = 8


def _round_up(a, m):
    return (a + m - 1) // m * m


def _num_tensorcores():
    """Best-effort TensorCore count (2 on v7x megacore, else 1)."""
    try:
        info = pltpu.get_tpu_info()
    except Exception:
        return 1
    for attr in ("num_tensorcores", "tensorcore_count", "num_tensor_cores",
                 "num_cores", "core_count"):
        v = getattr(info, attr, None)
        if isinstance(v, int) and v >= 1:
            return min(v, 2)
    return 1


def _choose_tile_rows(n_rows, d, rep, x_itemsize, y_itemsize,
                      budget_bytes=20 * 1024 * 1024, max_rows=32768):
    """Largest multiple-of-8 row tile whose VMEM working set fits the budget.

    Accounts for lane padding (y's D lanes pad up to 128 in VMEM), the
    double-buffered input DMA slabs, and ~4 full-width f32 temporaries
    (widened x, y_rep, diff/square, reduce intermediates).  The resident
    (8, rep*D) accumulator is tiny and not double-buffered, so it is ignored.
    """
    rd_pad = _round_up(rep * d, _LANES)
    d_pad = _round_up(d, _LANES)
    x_row = rd_pad * x_itemsize
    y_row = d_pad * y_itemsize
    tmp_row = 4 * rd_pad * 4                       # ~4 full-width f32 temporaries
    per_row = 2 * (x_row + y_row) + tmp_row        # inputs double-buffered
    tb = max(_SUBLANES,
             (budget_bytes // max(per_row, 1)) // _SUBLANES * _SUBLANES)
    tb = min(tb, max_rows)
    if n_rows <= tb:
        return n_rows                              # full-dim block is always legal
    return tb


def _mse_partial_kernel(x_ref, y_ref, acc_ref, *, rep, tb, acc_rows, nb_c,
                        n_rows, any_tail):
    c = pl.program_id(0)      # "parallel" (core-split) axis
    i = pl.program_id(1)      # "arbitrary" (streaming/accumulation) axis

    @pl.when(i == 0)
    def _zero():
        acc_ref[...] = jnp.zeros_like(acc_ref)

    x = x_ref[...].astype(jnp.float32)              # (tb, rep*D), lane-dense
    y = y_ref[...].astype(jnp.float32)              # (tb, D)
    # Equivalent of y.unsqueeze(1).repeat(1, rep, 1) after the (B, rep*D)
    # reshape: repeat y's D lanes `rep` times along the lane axis.
    # TODO(synk): check the bundle dump; if this concat lands on VALU rather
    # than XLU lane moves, switch to per-rep static lane slices of x.
    y_rep = jnp.concatenate([y] * rep, axis=-1)     # (tb, rep*D)
    d = x - y_rep
    sq = d * d

    def _row_reduce(v):
        # Fold the tb rows down to acc_rows sublanes before touching the
        # resident accumulator: the reshape splits the sublane-major axis on
        # an 8-row boundary, so the sum is pure vreg-wise VPU adds (no extra
        # full-tile acc load/store per step).
        if tb == acc_rows:
            return v
        return jnp.sum(v.reshape(tb // acc_rows, acc_rows, v.shape[-1]), axis=0)

    if not any_tail:
        # Steady state: no mask work at all.
        acc_ref[...] += _row_reduce(sq)
    else:
        tile_idx = c * nb_c + i
        is_tail = (tile_idx * tb + tb) > n_rows

        @pl.when(jnp.logical_not(is_tail))
        def _steady():                              # unmasked fast path
            acc_ref[...] += _row_reduce(sq)

        @pl.when(is_tail)
        def _tail():
            # Zero rows past the true batch (padded tail tile / clamped
            # duplicate tile) so the final mean divides by the true count.
            rows = tile_idx * tb + jax.lax.broadcasted_iota(
                jnp.int32, sq.shape, 0)
            acc_ref[...] += _row_reduce(jnp.where(rows < n_rows, sq, 0.0))


def mse_loss(x, y, *, tile_rows=None, num_cores=None,
             vmem_budget_bytes=20 * 1024 * 1024):
    """x: (B, 4, D), y: (B, D)  ->  scalar mean squared error (torch semantics)."""
    B, R, D = x.shape
    assert R == 4 and y.shape == (B, D), (x.shape, y.shape)
    rd = R * D

    x2 = x.reshape(B, rd)            # free reshape: x2[b, r*D + d] = x[b, r, d]

    if tile_rows is None:
        tb = _choose_tile_rows(B, D, R, x.dtype.itemsize, y.dtype.itemsize,
                               budget_bytes=vmem_budget_bytes)
    else:
        tb = min(int(tile_rows), B)
        if tb < B:
            tb = max(_SUBLANES, (tb // _SUBLANES) * _SUBLANES)  # (8,128) legality
    nb = pl.cdiv(B, tb)              # number of row tiles

    if num_cores is None:
        num_cores = _num_tensorcores()
    nc = 2 if (num_cores >= 2 and nb >= 2) else 1   # megacore split, v7x only
    nb_c = pl.cdiv(nb, nc)                          # row tiles per core
    any_tail = (nc * nb_c * tb) != B                # padded tail / duplicate tile

    # Resident accumulator height: a single (8, rd) vreg-tile slab when the
    # row tile is sublane-aligned, else the (tiny) full tile.
    acc_rows = _SUBLANES if tb % _SUBLANES == 0 else tb

    if nc * nb_c == nb:
        blk = lambda c, i: (c * nb_c + i, 0)
    else:
        # Second core would step past the last tile: clamp the block index
        # (its contribution is zeroed by the in-kernel tail mask).
        blk = lambda c, i: (jnp.minimum(c * nb_c + i, nb - 1), 0)

    kernel = functools.partial(_mse_partial_kernel, rep=R, tb=tb,
                               acc_rows=acc_rows, nb_c=nb_c, n_rows=B,
                               any_tail=any_tail)

    partials = pl.pallas_call(
        kernel,
        out_shape=jax.ShapeDtypeStruct((nc, acc_rows, rd), jnp.float32),
        grid_spec=pltpu.PrefetchScalarGridSpec(
            num_scalar_prefetch=0,
            grid=(nc, nb_c),
            in_specs=[
                pl.BlockSpec((tb, rd), blk),   # x tile, streamed
                pl.BlockSpec((tb, D), blk),    # y tile, streamed
            ],
            # Per-core resident accumulator: block index constant along the
            # arbitrary axis; leading None dim is squeezed -> kernel sees
            # (acc_rows, rd).
            out_specs=pl.BlockSpec((None, acc_rows, rd), lambda c, i: (c, 0, 0)),
        ),
        compiler_params=pltpu.CompilerParams(
            dimension_semantics=("parallel", "arbitrary"),
            vmem_limit_bytes=32 * 1024 * 1024,
        ),
    )(x2, y)

    n = B * R * D
    out = jnp.sum(partials) / jnp.float32(n)   # tiny (<= 2x8x rd) final reduce
    return out.astype(jnp.promote_types(x.dtype, y.dtype))


if __name__ == "__main__":
    # 1) Shapes implied by the module's forward: x (B, 4, D), y (B, D).
    kx, ky = jax.random.split(jax.random.PRNGKey(0))
    B, D = 2, 32
    x = jax.random.normal(kx, (B, 4, D), dtype=jnp.float32)
    y = jax.random.normal(ky, (B, D), dtype=jnp.float32)
    loss = mse_loss(x, y)
    jax.block_until_ready(loss)
    ref = jnp.mean((x - y[:, None, :]) ** 2)
    assert jnp.allclose(loss, ref, rtol=1e-5, atol=1e-6), (loss, ref)

    # 2) Multi-tile streamed path with a masked partial tail tile (single core).
    k2x, k2y = jax.random.split(jax.random.PRNGKey(0), 2)
    B2, D2 = 28, 32
    xb = jax.random.normal(k2x, (B2, 4, D2), dtype=jnp.float32)
    yb = jax.random.normal(k2y, (B2, D2), dtype=jnp.float32)
    loss2 = mse_loss(xb, yb, tile_rows=8, num_cores=1)
    jax.block_until_ready(loss2)
    ref2 = jnp.mean((xb - yb[:, None, :]) ** 2)
    assert jnp.allclose(loss2, ref2, rtol=1e-5, atol=1e-6), (loss2, ref2)

    # 3) In-step row reduction (tb > 8) + 2-way "parallel" split with a clamped
    #    duplicate tail tile (masked to zero contribution).
    k3x, k3y = jax.random.split(jax.random.PRNGKey(1), 2)
    B3, D3 = 48, 32
    xc = jax.random.normal(k3x, (B3, 4, D3), dtype=jnp.float32)
    yc = jax.random.normal(k3y, (B3, D3), dtype=jnp.float32)
    loss3 = mse_loss(xc, yc, tile_rows=16, num_cores=2)
    jax.block_until_ready(loss3)
    ref3 = jnp.mean((xc - yc[:, None, :]) ** 2)
    assert jnp.allclose(loss3, ref3, rtol=1e-5, atol=1e-6), (loss3, ref3)

    print("KERNEL_OK")
</pallas_src>

<mosaic_0001>
module attributes {stable_mosaic.version = 11 : i64} {
  func.func @_mse_partial_kernel(%arg0: i32, %arg1: i32, %arg2: memref<2x128xf32, #tpu.memory_space<vmem>>, %arg3: memref<2x32xf32, #tpu.memory_space<vmem>>, %arg4: memref<1x2x128xf32, #tpu.memory_space<vmem>>) attributes {dimension_semantics = [#tpu.dimension_semantics<parallel>, #tpu.dimension_semantics<arbitrary>], iteration_bounds = array<i64: 1, 1>, scalar_prefetch = 0 : i64, scratch_operands = 0 : i64, tpu.core_type = #tpu.core_type<tc>, window_params = [{transform_indices = @transform_0, window_bounds = array<i64: 2, 128>}, {transform_indices = @transform_1, window_bounds = array<i64: 2, 32>}, {transform_indices = @transform_2, window_bounds = array<i64: 1, 2, 128>}]} {
    %c0_i32 = arith.constant 0 : i32
    %0 = arith.cmpi eq, %arg1, %c0_i32 : i32
    %1 = arith.extui %0 : i1 to i32
    %c0_i32_0 = arith.constant 0 : i32
    %2 = arith.cmpi ne, %1, %c0_i32_0 : i32
    scf.if %2 {
      %cst = arith.constant 0.000000e+00 : f32
      %14 = vector.broadcast %cst : f32 to vector<2x128xf32>
      %c0_10 = arith.constant 0 : index
      %c0_11 = arith.constant 0 : index
      %c0_12 = arith.constant 0 : index
      %15 = vector.load %arg4[%c0_10, %c0_11, %c0_12] : memref<1x2x128xf32, #tpu.memory_space<vmem>>, vector<1x2x128xf32>
      %16 = vector.shape_cast %15 : vector<1x2x128xf32> to vector<2x128xf32>
      %17 = vector.shape_cast %14 : vector<2x128xf32> to vector<1x2x128xf32>
      tpu.vector_store %arg4[%c0_10, %c0_11, %c0_12], %17 {strides = array<i32>} : memref<1x2x128xf32, #tpu.memory_space<vmem>>, vector<1x2x128xf32>,
    } else {
    }
    %c0 = arith.constant 0 : index
    %c0_1 = arith.constant 0 : index
    %3 = vector.load %arg2[%c0, %c0_1] : memref<2x128xf32, #tpu.memory_space<vmem>>, vector<2x128xf32>
    %c0_2 = arith.constant 0 : index
    %c0_3 = arith.constant 0 : index
    %4 = vector.load %arg3[%c0_2, %c0_3] : memref<2x32xf32, #tpu.memory_space<vmem>>, vector<2x32xf32>
    %5 = tpu.concatenate %4, %4, %4, %4 in 1 : vector<2x32xf32>, vector<2x32xf32>, vector<2x32xf32>, vector<2x32xf32> -> vector<2x128xf32>
    %6 = arith.subf %3, %5 : vector<2x128xf32>
    %7 = arith.mulf %6, %6 : vector<2x128xf32>
    %c0_4 = arith.constant 0 : index
    %c0_5 = arith.constant 0 : index
    %c0_6 = arith.constant 0 : index
    %8 = vector.load %arg4[%c0_4, %c0_5, %c0_6] : memref<1x2x128xf32, #tpu.memory_space<vmem>>, vector<1x2x128xf32>
    %9 = vector.shape_cast %8 : vector<1x2x128xf32> to vector<2x128xf32>
    %10 = arith.addf %9, %7 : vector<2x128xf32>
    %c0_7 = arith.constant 0 : index
    %c0_8 = arith.constant 0 : index
    %c0_9 = arith.constant 0 : index
    %11 = vector.load %arg4[%c0_7, %c0_8, %c0_9] : memref<1x2x128xf32, #tpu.memory_space<vmem>>, vector<1x2x128xf32>
    %12 = vector.shape_cast %11 : vector<1x2x128xf32> to vector<2x128xf32>
    %13 = vector.shape_cast %10 : vector<2x128xf32> to vector<1x2x128xf32>
    tpu.vector_store %arg4[%c0_7, %c0_8, %c0_9], %13 {strides = array<i32>} : memref<1x2x128xf32, #tpu.memory_space<vmem>>, vector<1x2x128xf32>,
    return
  }
  func.func @transform_0(%arg0: i32, %arg1: i32) -> (i32, i32) {
    %c1_i32 = arith.constant 1 : i32
    %0 = arith.muli %arg0, %c1_i32 : i32
    %1 = arith.addi %0, %arg1 : i32
    %c0_i32 = arith.constant 0 : i32
    %c0_i32_0 = arith.constant 0 : i32
    return %1, %c0_i32 : i32, i32
  }
  func.func @transform_1(%arg0: i32, %arg1: i32) -> (i32, i32) {
    %c1_i32 = arith.constant 1 : i32
    %0 = arith.muli %arg0, %c1_i32 : i32
    %1 = arith.addi %0, %arg1 : i32
    %c0_i32 = arith.constant 0 : i32
    %c0_i32_0 = arith.constant 0 : i32
    return %1, %c0_i32 : i32, i32
  }
  func.func @transform_2(%arg0: i32, %arg1: i32) -> (i32, i32, i32) {
    %c0_i32 = arith.constant 0 : i32
    %c0_i32_0 = arith.constant 0 : i32
    %c0_i32_1 = arith.constant 0 : i32
    return %arg0, %c0_i32, %c0_i32_0 : i32, i32, i32
  }
}

</mosaic_0001>

<llo_original>
// kernel: tpu_custom_call.1
$region0: #{tpu_custom_call.1}
  #allocation0 [shape = 'u32[]', space=smem, size = 0x4, offset = 0x4, fixed_abs, tag = 'smem constant byte address 0x4 - core index']
  #allocation1 [shape = 'u32[144,128]{1,0:T(1,128)}', space=vmem, size = 0x12000, scoped, tag = 'internal scratch']
  %s0 = inlined_call_operand.hbm [shape: f32[2,128], index: 0, kind: input, shape index: {}]
  %s1 = inlined_call_operand.hbm [shape: f32[2,32], index: 1, kind: input, shape index: {}]
  %s2 = inlined_call_operand.hbm [shape: f32[1,2,128], index: 2, kind: output, shape index: {}]
  %s3 = sld [smem:[#allocation0]]
  $region30: #{tpu_custom_call.1} parent=0
    _
  %s5 = ssub.s32 1, %s3
  %s6 = scalar_select 0, %s5, %s3
  $region1: #{tpu_custom_call.1} parent=0
    #allocation2 [shape = 'u8[1024]{0}', space=vmem, size = 0x400, scoped, tag = 'input window, operand 0, single buffered']
    #allocation3 [shape = 's32[1]{0}', space=sflag, size = 0x4, scoped, tag = 'scoped memory for tpu_custom_call.1']
    #allocation4 [shape = 's32[1]{0}', space=sflag, size = 0x4, scoped, tag = 'scoped memory for tpu_custom_call.1']
    #allocation5 [shape = 'u8[1024]{0}', space=vmem, size = 0x400, scoped, tag = 'input window, operand 1, single buffered']
    #allocation6 [shape = 's32[1]{0}', space=sflag, size = 0x4, scoped, tag = 'scoped memory for tpu_custom_call.1']
    #allocation7 [shape = 'u8[1024]{0}', space=vmem, size = 0x400, scoped, tag = 'output window, operand 0, single buffered']
    %7 = vsyncpa [#allocation3], 0
    %8 = vsyncpa [#allocation6], 0
    %9 = vsyncpa [#allocation4], 0
    // Predicated region
    $region2: #{tpu_custom_call.1} parent=1 // pred_check
      _
    $region3: #{tpu_custom_call.1} parent=1 // pred_check_branch
      %11 = sbr.rel (0) target = $region5
    $region4: #{tpu_custom_call.1} parent=1 // pred_region
      %s12 = sadd.s32 0, 0
      %s14 = ssub.s32 32, 32
      %15 = vsyncadd [#allocation3], %s14
      %s16 = smul.addr %s12, 32
      %s17 = scalar_lea.hbm %s0, %s16
      %s19 = sshll.u32 [#allocation2], 4
      %s20 = int_to_ptr.vmem [resolvable:$true] %s19
      %22 = dma.hbm_to_vmem [thread:$0]  %s17, 32, %s20, [#allocation3]
    $region5: #{tpu_custom_call.1} parent=1 // pred_fallthru
      _
    // Predicated region
    $region6: #{tpu_custom_call.1} parent=1 // pred_check
      _
    $region7: #{tpu_custom_call.1} parent=1 // pred_check_branch
      %24 = sbr.rel (0) target = $region9
    $region8: #{tpu_custom_call.1} parent=1 // pred_region
      %s25 = sadd.s32 0, 0
      %s27 = ssub.s32 32, 32
      %28 = vsyncadd [#allocation6], %s27
      %s29 = smul.addr %s25, 32
      %s30 = scalar_lea.hbm %s1, %s29
      %s32 = sshll.u32 [#allocation5], 4
      %s33 = int_to_ptr.vmem [resolvable:$true] %s32
      %35 = dma.hbm_to_vmem [thread:$0]  %s30, 32, %s33, [#allocation6]
    $region9: #{tpu_custom_call.1} parent=1 // pred_fallthru
      _
    // Predicated region
    $region10: #{tpu_custom_call.1} parent=1 // pred_check
      _
    $region11: #{tpu_custom_call.1} parent=1 // pred_check_branch
      %37 = sbr.rel (0) target = $region13
    $region12: #{tpu_custom_call.1} parent=1 // pred_region
      %38 = dma.done [#allocation3], 32
    $region13: #{tpu_custom_call.1} parent=1 // pred_fallthru
      _
    // Predicated region
    $region14: #{tpu_custom_call.1} parent=1 // pred_check
      _
    $region15: #{tpu_custom_call.1} parent=1 // pred_check_branch
      %40 = sbr.rel (0) target = $region17
    $region16: #{tpu_custom_call.1} parent=1 // pred_region
      %41 = dma.done [#allocation6], 32
    $region17: #{tpu_custom_call.1} parent=1 // pred_fallthru
      _
    %s42 = sadd.s32 0, 0
    %s43 = sadd.s32 0, 0
    %p44 = scmp.eq.s32.totalorder 0, 0
    // Predicated region
    $region18: #{tpu_custom_call.1} parent=1 // pred_check
      %p45 = pneg %p44
    $region19: #{tpu_custom_call.1} parent=1 // pred_check_branch
      %47 = sbr.rel (%p45) target = $region21
    $region20: #{tpu_custom_call.1} parent=1 // pred_region
      %48 = vst [vmem:[#allocation7] sm:$0x3] 0.0
    $region21: #{tpu_custom_call.1} parent=1 // pred_fallthru
      _
    %v49 = vld [vmem:[#allocation2] sm:$0x3]
    %v50 = vld [vmem:[#allocation5] sm:$0x3]
    %52 = vrot.lane.b32.xlu0 %v50, 32
    %v53 = vpop.permute.xlu0 %52
    %55 = vrot.lane.b32.xlu0 %v50, 64
    %v56 = vpop.permute.xlu0 %55
    %58 = vrot.lane.b32.xlu0 %v50, 96
    %v59 = vpop.permute.xlu0 %58
    %vm61 = vcmask 261120
    %v62 = vsel %vm61, %v50, %v53
    %vm63 = vcmask 523264
    %v64 = vsel %vm63, %v62, %v56
    %vm65 = vcmask 785408
    %v66 = vsel %vm65, %v64, %v59
    %v67 = vsub.f32 %v49, %v66
    %v68 = vmul.f32 %v67, %v67
    %v69 = vld [vmem:[#allocation7] sm:$0x3]
    %v70 = vadd.f32 %v69, %v68
    %71 = vst [vmem:[#allocation7] sm:$0x3] %v70
    // Predicated region
    $region22: #{tpu_custom_call.1} parent=1 // pred_check
      _
    $region23: #{tpu_custom_call.1} parent=1 // pred_check_branch
      %73 = sbr.rel (0) target = $region25
    $region24: #{tpu_custom_call.1} parent=1 // pred_region
      %s75 = ssub.s32 32, 32
      %76 = vsyncadd [#allocation4], %s75
      %s78 = sshll.u32 [#allocation7], 4
      %s79 = int_to_ptr.vmem [resolvable:$true] %s78
      %81 = dma.vmem_to_hbm [thread:$0]  %s79, 32, %s2, [#allocation4]
    $region25: #{tpu_custom_call.1} parent=1 // pred_fallthru
      _
    // Predicated region
    $region26: #{tpu_custom_call.1} parent=1 // pred_check
      _
    $region27: #{tpu_custom_call.1} parent=1 // pred_check_branch
      %83 = sbr.rel (0) target = $region29
    $region28: #{tpu_custom_call.1} parent=1 // pred_region
      %84 = dma.done [#allocation4], 32
    $region29: #{tpu_custom_call.1} parent=1 // pred_fallthru
      _
    %85 = vsyncpa [#allocation3], 1
    %86 = vsyncpa [#allocation6], 1
    %87 = vsyncpa [#allocation4], 1

</llo_original>
